<compile_context>
chip_gen: v6e
topology: v6e:2x2x1
jax: 0.10.0
libtpu: 0.0.40
codegen_flags: <defaults>
</compile_context>

<pallas_src>
import functools
import math

import jax
import jax.numpy as jnp
from jax.experimental import pallas as pl
from jax.experimental.pallas import tpu as pltpu


# Below this element count a single fused XLA op beats pallas_call launch cost.
_SMALL_N = 256 * 1024
# Double-buffered VMEM working-set budget (x + mask + out, x2 buffers).
# Kept under v5e's 16 MiB scoped default; tiny vs v6e/v7x budgets.
_VMEM_TILE_BUDGET = 9 * 1024 * 1024


def _dropout_kernel(x_ref, mask_ref, o_ref, *, inv_keep):
    # Elementwise hot path: y = x * mask * (1/(1-p)) in f32, then cast.
    # The kernel is HBM-bandwidth bound; the upcast/multiplies ride free on
    # otherwise-idle VPU slots.
    x = x_ref[...].astype(jnp.float32)
    m = mask_ref[...].astype(jnp.float32)
    o_ref[...] = (x * m * inv_keep).astype(o_ref.dtype)


def _round_up(a, b):
    return ((a + b - 1) // b) * b


def _pick_lanes(n):
    """Largest lane width (multiple of 128) that exactly divides n (no padding)."""
    for lanes in (1024, 512, 256, 128):
        if n % lanes == 0:
            return lanes
    return None


def _choose_tile_rows(rows, lanes, itemsizes, align):
    """Rows per grid step, honoring dtype sublane tiling and VMEM/TC balance."""
    if rows <= align:
        return rows  # full-dim block: always a legal tiling, single tile
    bytes_per_row = lanes * sum(itemsizes)
    # Cap by double-buffered VMEM budget (multiple of `align`).
    vmem_cap = max(align, (_VMEM_TILE_BUDGET // (2 * bytes_per_row)) // align * align)
    # Cap so there are >= 4 grid tiles -> both v7x TensorCores get work.
    tc_cap = _round_up(pl.cdiv(rows, 4), align)
    return max(align, min(vmem_cap, tc_cap))


def _dropout_pallas(x2, m2, inv_keep, out_dtype):
    rows, lanes = x2.shape
    itemsizes = (x2.dtype.itemsize, m2.dtype.itemsize, jnp.dtype(out_dtype).itemsize)
    # Sublane-tile alignment: 32 for any 8-bit input, 16 for 16-bit, else 8.
    min_item = min(x2.dtype.itemsize, m2.dtype.itemsize)
    align = 32 if min_item == 1 else (16 if min_item == 2 else 8)

    tile_rows = _choose_tile_rows(rows, lanes, itemsizes, align)
    num_tiles = pl.cdiv(rows, tile_rows)  # ragged last tile handled by Pallas

    block = pl.BlockSpec((tile_rows, lanes), lambda i: (i, 0))

    n = rows * lanes
    cost = pl.CostEstimate(
        flops=2 * n,
        transcendentals=0,
        bytes_accessed=n * sum(itemsizes),
    )

    return pl.pallas_call(
        functools.partial(_dropout_kernel, inv_keep=inv_keep),
        out_shape=jax.ShapeDtypeStruct((rows, lanes), out_dtype),
        grid=(num_tiles,),
        in_specs=[block, block],
        out_specs=block,
        compiler_params=pltpu.CompilerParams(
            dimension_semantics=("parallel",),
        ),
        cost_estimate=cost,
    )(x2, m2)


@functools.partial(jax.jit, static_argnames=("p", "training", "use_pallas"))
def custom_dropout_forward(x, mask, p=0.1, training=True, use_pallas=None):
    """Pallas implementation of CustomDropoutLayer.forward.

    use_pallas=None  -> auto (Pallas for large, nicely-factoring tensors,
                        fused jnp fallback otherwise)
    use_pallas=True  -> force the Pallas kernel (still falls back if the
                        element count is not a multiple of 128)
    """
    if not training:
        return x  # eval mode: identity, matches the PyTorch module
    if not (0.0 <= p < 1.0):
        raise ValueError(f"dropout probability must be in [0, 1), got {p}")

    inv_keep = float(1.0 / (1.0 - p))  # compile-time immediate
    n = math.prod(x.shape)
    lanes = _pick_lanes(n)

    if use_pallas is None:
        use_pallas = (n >= _SMALL_N) and (lanes is not None)

    if (not use_pallas) or lanes is None:
        # Single fused XLA op: optimal for tiny tensors / awkward sizes.
        return (x.astype(jnp.float32) * mask.astype(jnp.float32) * inv_keep
                ).astype(x.dtype)

    rows = n // lanes
    # Free reshapes (contiguous) -> lane-dense 2D slab, no padding, no tail copy.
    x2 = x.reshape(rows, lanes)
    m2 = mask.reshape(rows, lanes)
    out2 = _dropout_pallas(x2, m2, inv_keep, x.dtype)
    return out2.reshape(x.shape)


def init_mask(key, shape, p=0.1, dtype=jnp.uint8):
    """Equivalent of CustomDropoutLayer.init_mask: Bernoulli(1 - p) mask.

    Default uint8 storage cuts mask HBM traffic 4x vs f32; values are 0/1.
    """
    # TODO(synk): PyTorch sets requires_grad_(True) on the mask; gradient
    # tracking of the mask itself has no kernel-side equivalent here.
    return jax.random.bernoulli(key, 1.0 - p, shape).astype(dtype)


if __name__ == "__main__":
    key = jax.random.PRNGKey(0)
    kx, km = jax.random.split(key)

    B, C, H, W = 2, 4, 16, 16
    p = 0.1

    x = jax.random.normal(kx, (B, C, H, W), dtype=jnp.float32)
    mask = init_mask(km, (B, C, H, W), p=p, dtype=jnp.uint8)

    # Force the Pallas path so the kernel is exercised even at this small
    # demo size (the auto path would pick the fused-jnp fallback).
    y = custom_dropout_forward(x, mask, p=p, training=True, use_pallas=True)
    jax.block_until_ready(y)

    # Reference (PyTorch forward semantics) in plain JAX.
    y_ref = x * mask.astype(jnp.float32) / (1.0 - p)
    assert y.shape == x.shape and y.dtype == x.dtype
    assert jnp.allclose(y, y_ref, atol=1e-6, rtol=1e-5)

    # Auto path (small input -> fused jnp) must agree too.
    y_auto = custom_dropout_forward(x, mask, p=p, training=True)
    assert jnp.allclose(y_auto, y_ref, atol=1e-6, rtol=1e-5)

    # Eval mode is identity.
    y_eval = custom_dropout_forward(x, mask, p=p, training=False)
    assert jnp.array_equal(y_eval, x)

    print("KERNEL_OK")
</pallas_src>

<mosaic_0001>
module attributes {stable_mosaic.version = 11 : i64} {
  func.func @_dropout_kernel(%arg0: i32, %arg1: memref<2x1024xf32, #tpu.memory_space<vmem>>, %arg2: memref<2x1024xi8, #tpu.memory_space<vmem>>, %arg3: memref<2x1024xf32, #tpu.memory_space<vmem>>) attributes {dimension_semantics = [#tpu.dimension_semantics<parallel>], iteration_bounds = array<i64: 1>, scalar_prefetch = 0 : i64, scratch_operands = 0 : i64, tpu.core_type = #tpu.core_type<tc>, window_params = [{transform_indices = @transform_0, window_bounds = array<i64: 2, 1024>}, {transform_indices = @transform_1, window_bounds = array<i64: 2, 1024>}, {transform_indices = @transform_2, window_bounds = array<i64: 2, 1024>}]} {
    %c0 = arith.constant 0 : index
    %c0_0 = arith.constant 0 : index
    %0 = vector.load %arg1[%c0, %c0_0] : memref<2x1024xf32, #tpu.memory_space<vmem>>, vector<2x1024xf32>
    %c0_1 = arith.constant 0 : index
    %c0_2 = arith.constant 0 : index
    %1 = vector.load %arg2[%c0_1, %c0_2] : memref<2x1024xi8, #tpu.memory_space<vmem>>, vector<2x1024xi8>
    %2 = arith.uitofp %1 : vector<2x1024xi8> to vector<2x1024xf32>
    %3 = arith.mulf %0, %2 : vector<2x1024xf32>
    %cst = arith.constant 1.11111116 : f32
    %4 = vector.broadcast %cst : f32 to vector<2x1024xf32>
    %5 = arith.mulf %3, %4 : vector<2x1024xf32>
    %c0_3 = arith.constant 0 : index
    %c0_4 = arith.constant 0 : index
    %6 = vector.load %arg3[%c0_3, %c0_4] : memref<2x1024xf32, #tpu.memory_space<vmem>>, vector<2x1024xf32>
    tpu.vector_store %arg3[%c0_3, %c0_4], %5 {strides = array<i32>} : memref<2x1024xf32, #tpu.memory_space<vmem>>, vector<2x1024xf32>,
    return
  }
  func.func @transform_0(%arg0: i32) -> (i32, i32) {
    %c0_i32 = arith.constant 0 : i32
    %c0_i32_0 = arith.constant 0 : i32
    return %arg0, %c0_i32 : i32, i32
  }
  func.func @transform_1(%arg0: i32) -> (i32, i32) {
    %c0_i32 = arith.constant 0 : i32
    %c0_i32_0 = arith.constant 0 : i32
    return %arg0, %c0_i32 : i32, i32
  }
  func.func @transform_2(%arg0: i32) -> (i32, i32) {
    %c0_i32 = arith.constant 0 : i32
    %c0_i32_0 = arith.constant 0 : i32
    return %arg0, %c0_i32 : i32, i32
  }
}

</mosaic_0001>

<llo_original>
// kernel: custom_dropout_forward.1
$region0: #{custom_dropout_forward.1}
  #allocation0 [shape = 'u32[]', space=smem, size = 0x4, offset = 0x4, fixed_abs, tag = 'smem constant byte address 0x4 - core index']
  #allocation1 [shape = 'u32[144,128]{1,0:T(1,128)}', space=vmem, size = 0x12000, scoped, tag = 'internal scratch']
  %s0 = inlined_call_operand.vmem [shape: f32[2,1024], index: 0, kind: input, shape index: {}]
  %s1 = inlined_call_operand.vmem [shape: u8[2,1024], index: 1, kind: input, shape index: {}]
  %s2 = inlined_call_operand.vmem [shape: f32[2,1024], index: 2, kind: output, shape index: {}]
  %s3 = sld [smem:[#allocation0]]
  $region18: #{custom_dropout_forward.1} parent=0
    _
  %s5 = ssub.s32 1, %s3
  %s6 = scalar_select 0, %s5, %s3
  // Predicated region
  $region2: #{custom_dropout_forward.1} parent=0 // pred_check
    _
  $region3: #{custom_dropout_forward.1} parent=0 // pred_check_branch
    %8 = sbr.rel (0) target = $region5
  $region4: #{custom_dropout_forward.1} parent=0 // pred_region
    _
  $region5: #{custom_dropout_forward.1} parent=0 // pred_fallthru
    _
  // Predicated region
  $region6: #{custom_dropout_forward.1} parent=0 // pred_check
    _
  $region7: #{custom_dropout_forward.1} parent=0 // pred_check_branch
    %10 = sbr.rel (0) target = $region9
  $region8: #{custom_dropout_forward.1} parent=0 // pred_region
    _
  $region9: #{custom_dropout_forward.1} parent=0 // pred_fallthru
    _
  %v11 = vld [vmem:[%s0] sm:$0xff]
  %v12 = vld [vmem:[%s0 + $0x8] sm:$0xff]
  %v13 = vld [vmem:[%s1] sm:$0xff]
  %v14 = vunpack.c.0.s8 %v13
  %v15 = vunpack.c.1.s8 %v13
  %v16 = vunpack.c.2.s8 %v13
  %v17 = vunpack.c.3.s8 %v13
  %v18 = vand.u32 %v14, 255
  %v19 = vand.u32 %v15, 255
  %v20 = vand.u32 %v16, 255
  %v21 = vand.u32 %v17, 255
  %v22 = vcvt.s32.f32 %v18
  %v23 = vcvt.s32.f32 %v19
  %v24 = vcvt.s32.f32 %v20
  %v25 = vcvt.s32.f32 %v21
  %v31 = vunpack.c.l.s4 1983009808
  %v32 = vunpack.c.0.s8 %v31
  %v33 = vlaneseq
  %v34 = vshrl.u32 %v33, 7
  %v35 = vsub.s32 %v32, %v34
  %v36 = vrot.slane %v22, %v35
  %v38 = vunpack.c.l.s4 1983009808
  %v39 = vunpack.c.0.s8 %v38
  %v40 = vlaneseq
  %v41 = vshrl.u32 %v40, 7
  %v42 = vsub.s32 %v39, %v41
  %v43 = vrot.slane %v23, %v42
  %v44 = vcombine.low %v36, %v43
  %v46 = vunpack.c.l.s4 1983009808
  %v47 = vunpack.c.0.s8 %v46
  %v48 = vlaneseq
  %v49 = vshrl.u32 %v48, 7
  %v50 = vsub.s32 %v47, %v49
  %v51 = vrot.slane %v24, %v50
  %v53 = vunpack.c.l.s4 1983009808
  %v54 = vunpack.c.0.s8 %v53
  %v55 = vlaneseq
  %v56 = vshrl.u32 %v55, 7
  %v57 = vsub.s32 %v54, %v56
  %v58 = vrot.slane %v25, %v57
  %v59 = vcombine.low %v51, %v58
  %v62 = vmul.f32 %v11, %v44
  %v63 = vmul.f32 %v12, %v59
  %v64 = vmul.f32 %v62, 1.1111112
  %v65 = vmul.f32 %v63, 1.1111112
  %66 = vst [vmem:[%s2] sm:$0xff] %v64
  %67 = vst [vmem:[%s2 + $0x8] sm:$0xff] %v65
  // Predicated region
  $region10: #{custom_dropout_forward.1} parent=0 // pred_check
    _
  $region11: #{custom_dropout_forward.1} parent=0 // pred_check_branch
    %69 = sbr.rel (0) target = $region13
  $region12: #{custom_dropout_forward.1} parent=0 // pred_region
    _
  $region13: #{custom_dropout_forward.1} parent=0 // pred_fallthru
    _
  // Predicated region
  $region14: #{custom_dropout_forward.1} parent=0 // pred_check
    _
  $region15: #{custom_dropout_forward.1} parent=0 // pred_check_branch
    %71 = sbr.rel (0) target = $region17
  $region16: #{custom_dropout_forward.1} parent=0 // pred_region
    _
  $region17: #{custom_dropout_forward.1} parent=0 // pred_fallthru
    _

</llo_original>
